<compile_context>
chip_gen: v6e
topology: v6e:2x2x1
jax: 0.10.0
libtpu: 0.0.40
codegen_flags: <defaults>
</compile_context>

<pallas_src>
import jax
import jax.numpy as jnp
from jax.experimental import pallas as pl
from jax.experimental.pallas import tpu as pltpu


def _scale_kernel(x_ref, s_ref, o_ref):
    # x_ref: (TR, TL) tile.
    # s_ref: (TR, 1) per-row scale  OR  (1, TL) per-lane scale (broadcasts).
    xf = x_ref[...].astype(jnp.float32)
    sf = s_ref[...].astype(jnp.float32)
    o_ref[...] = (xf * sf).astype(o_ref.dtype)


def _round_up(v, m):
    return ((v + m - 1) // m) * m


def _round_down(v, m):
    return (v // m) * m


def _scale_2d(x2, scale2, *, tile_bytes=4 * 1024 * 1024, max_tl=4096, donate=False):
    """Elementwise x2 * scale2 where scale2 is (R, 1) or (1, Lanes)."""
    R, lanes = x2.shape
    itemsize = jnp.dtype(x2.dtype).itemsize
    # Sublane alignment by dtype packing (8 for 4B, 16 for 2B, 32 for 1B).
    sub_align = {4: 8, 2: 16, 1: 32}.get(itemsize, 8)
    assert max_tl % 128 == 0

    # --- tile selection: lane-dense lanes, ~tile_bytes per tile (dtype-aware) ---
    TL = lanes if lanes <= max_tl else max_tl
    rows_budget = max(sub_align, tile_bytes // max(1, TL * itemsize))
    TR = R if R <= rows_budget else _round_down(rows_budget, sub_align)

    # --- guarantee >= 2 grid blocks when the shape allows (v7x megacore) -------
    if pl.cdiv(R, TR) * pl.cdiv(lanes, TL) < 2:
        if R > sub_align:
            TR = _round_up((R + 1) // 2, sub_align)
        elif lanes > 128:
            TL = _round_up((lanes + 1) // 2, 128)

    grid = (pl.cdiv(R, TR), pl.cdiv(lanes, TL))

    row_scaled = scale2.shape == (R, 1)
    if row_scaled:
        s_spec = pl.BlockSpec((TR, 1), lambda r, l: (r, 0))  # constant across L axis
    else:
        s_spec = pl.BlockSpec((1, TL), lambda r, l: (0, l))  # constant across R axis

    extra = {}
    if donate:
        extra["input_output_aliases"] = {0: 0}

    return pl.pallas_call(
        _scale_kernel,
        out_shape=jax.ShapeDtypeStruct((R, lanes), x2.dtype),
        grid=grid,
        in_specs=[
            pl.BlockSpec((TR, TL), lambda r, l: (r, l)),
            s_spec,
        ],
        out_specs=pl.BlockSpec((TR, TL), lambda r, l: (r, l)),
        compiler_params=pltpu.CompilerParams(
            dimension_semantics=("parallel", "parallel"),
            vmem_limit_bytes=40 * 1024 * 1024,  # ~16 MiB actually used; < v7x 64 MiB
        ),
        **extra,
    )(x2, scale2)


def scale_conv(x, scaler, *, donate=False):
    """x: (B, C, L) array, scaler: (C,) array -> (B, C, L) == x * scaler[:, None]."""
    B, C, L = x.shape
    scaler_f32 = scaler.astype(jnp.float32)

    if L % 128 == 0 and L >= 128:
        # Lane axis already dense: flatten rows, per-row scale (row b*C+c -> scaler[c]).
        x2 = x.reshape(B * C, L)
        scale2 = jnp.tile(scaler_f32, B).reshape(B * C, 1)
    else:
        # Small / ragged L: fold channels into the lane axis for lane-dense stores;
        # lane c*L + j -> scaler[c].
        x2 = x.reshape(B, C * L)
        scale2 = jnp.repeat(scaler_f32, L).reshape(1, C * L)

    out2 = _scale_2d(x2, scale2, donate=donate)
    return out2.reshape(B, C, L)


if __name__ == "__main__":
    key = jax.random.PRNGKey(0)
    k1, k2, k3 = jax.random.split(key, 3)

    # Small shape implied by the module's forward: (batch, nfeature, length).
    B, C, L = 2, 4, 16
    x = jax.random.normal(k1, (B, C, L), dtype=jnp.float32)

    # Matches nn.Parameter(torch.ones(nfeature)) init.
    scaler = jnp.ones((C,), dtype=jnp.float32)
    out = scale_conv(x, scaler)
    jax.block_until_ready(out)
    ref = x * scaler[None, :, None]
    assert out.shape == (B, C, L)
    assert jnp.allclose(out, ref, atol=1e-6), "mismatch vs reference (ones scaler)"

    # Non-trivial scaler exercises the lane-folded path (L=16 < 128).
    scaler2 = jnp.arange(1.0, C + 1.0, dtype=jnp.float32)
    out2 = scale_conv(x, scaler2)
    jax.block_until_ready(out2)
    assert jnp.allclose(out2, x * scaler2[None, :, None], atol=1e-6), "mismatch (scaler2)"

    # Lane-dense path (L % 128 == 0) with a forced multi-block (megacore) grid.
    B2, C2, L2 = 4, 8, 256
    x_b = jax.random.normal(k2, (B2, C2, L2), dtype=jnp.float32)
    s_b = jax.random.normal(k3, (C2,), dtype=jnp.float32)
    out_b = scale_conv(x_b, s_b)
    jax.block_until_ready(out_b)
    assert jnp.allclose(out_b, x_b * s_b[None, :, None], atol=1e-5), "mismatch (lane-dense)"

    # Ragged L (not a multiple of 128): lane-folded path with ragged lane tiles.
    B3, C3, L3 = 2, 4, 200
    x_r = jax.random.normal(k1, (B3, C3, L3), dtype=jnp.float32)
    s_r = jnp.arange(1.0, C3 + 1.0, dtype=jnp.float32)
    out_r = scale_conv(x_r, s_r)
    jax.block_until_ready(out_r)
    assert jnp.allclose(out_r, x_r * s_r[None, :, None], atol=1e-5), "mismatch (ragged L)"

    print("KERNEL_OK")
</pallas_src>

<mosaic_0001>
module attributes {stable_mosaic.version = 11 : i64} {
  func.func @_scale_kernel(%arg0: i32, %arg1: i32, %arg2: memref<2x64xf32, #tpu.memory_space<vmem>>, %arg3: memref<1x64xf32, #tpu.memory_space<vmem>>, %arg4: memref<2x64xf32, #tpu.memory_space<vmem>>) attributes {dimension_semantics = [#tpu.dimension_semantics<parallel>, #tpu.dimension_semantics<parallel>], iteration_bounds = array<i64: 1, 1>, scalar_prefetch = 0 : i64, scratch_operands = 0 : i64, tpu.core_type = #tpu.core_type<tc>, window_params = [{transform_indices = @transform_0, window_bounds = array<i64: 2, 64>}, {transform_indices = @transform_1, window_bounds = array<i64: 1, 64>}, {transform_indices = @transform_2, window_bounds = array<i64: 2, 64>}]} {
    %c0 = arith.constant 0 : index
    %c0_0 = arith.constant 0 : index
    %0 = vector.load %arg2[%c0, %c0_0] : memref<2x64xf32, #tpu.memory_space<vmem>>, vector<2x64xf32>
    %c0_1 = arith.constant 0 : index
    %c0_2 = arith.constant 0 : index
    %1 = vector.load %arg3[%c0_1, %c0_2] : memref<1x64xf32, #tpu.memory_space<vmem>>, vector<1x64xf32>
    %2 = vector.broadcast %1 : vector<1x64xf32> to vector<2x64xf32>
    %3 = arith.mulf %0, %2 : vector<2x64xf32>
    %c0_3 = arith.constant 0 : index
    %c0_4 = arith.constant 0 : index
    %4 = vector.load %arg4[%c0_3, %c0_4] : memref<2x64xf32, #tpu.memory_space<vmem>>, vector<2x64xf32>
    tpu.vector_store %arg4[%c0_3, %c0_4], %3 {strides = array<i32>} : memref<2x64xf32, #tpu.memory_space<vmem>>, vector<2x64xf32>,
    return
  }
  func.func @transform_0(%arg0: i32, %arg1: i32) -> (i32, i32) {
    %c0_i32 = arith.constant 0 : i32
    return %arg0, %arg1 : i32, i32
  }
  func.func @transform_1(%arg0: i32, %arg1: i32) -> (i32, i32) {
    %c0_i32 = arith.constant 0 : i32
    %c0_i32_0 = arith.constant 0 : i32
    return %c0_i32, %arg1 : i32, i32
  }
  func.func @transform_2(%arg0: i32, %arg1: i32) -> (i32, i32) {
    %c0_i32 = arith.constant 0 : i32
    return %arg0, %arg1 : i32, i32
  }
}

</mosaic_0001>

<llo_original>
// kernel: tpu_custom_call.1
$region0: #{tpu_custom_call.1}
  #allocation0 [shape = 'u32[]', space=smem, size = 0x4, offset = 0x4, fixed_abs, tag = 'smem constant byte address 0x4 - core index']
  #allocation1 [shape = 'u32[144,128]{1,0:T(1,128)}', space=vmem, size = 0x12000, scoped, tag = 'internal scratch']
  %s0 = inlined_call_operand.hbm [shape: f32[2,64], index: 0, kind: input, shape index: {}]
  %s1 = inlined_call_operand.vmem [shape: f32[1,64], index: 1, kind: input, shape index: {}]
  %s2 = inlined_call_operand.hbm [shape: f32[2,64], index: 2, kind: output, shape index: {}]
  %s3 = sld [smem:[#allocation0]]
  $region22: #{tpu_custom_call.1} parent=0
    _
  %s5 = ssub.s32 1, %s3
  %s6 = scalar_select 0, %s5, %s3
  $region1: #{tpu_custom_call.1} parent=0
    #allocation2 [shape = 'u8[1024]{0}', space=vmem, size = 0x400, scoped, tag = 'input window, operand 0, single buffered']
    #allocation3 [shape = 's32[1]{0}', space=sflag, size = 0x4, scoped, tag = 'scoped memory for tpu_custom_call.1']
    #allocation4 [shape = 's32[1]{0}', space=sflag, size = 0x4, scoped, tag = 'scoped memory for tpu_custom_call.1']
    #allocation5 [shape = 'u8[1024]{0}', space=vmem, size = 0x400, scoped, tag = 'output window, operand 0, single buffered']
    %7 = vsyncpa [#allocation3], 0
    %8 = vsyncpa [#allocation4], 0
    // Predicated region
    $region2: #{tpu_custom_call.1} parent=1 // pred_check
      _
    $region3: #{tpu_custom_call.1} parent=1 // pred_check_branch
      %10 = sbr.rel (0) target = $region5
    $region4: #{tpu_custom_call.1} parent=1 // pred_region
      %s12 = ssub.s32 32, 32
      %13 = vsyncadd [#allocation3], %s12
      %s15 = sshll.u32 [#allocation2], 4
      %s16 = int_to_ptr.vmem [resolvable:$true] %s15
      %18 = dma.hbm_to_vmem [thread:$0]  %s0, 32, %s16, [#allocation3]
    $region5: #{tpu_custom_call.1} parent=1 // pred_fallthru
      _
    // Predicated region
    $region6: #{tpu_custom_call.1} parent=1 // pred_check
      _
    $region7: #{tpu_custom_call.1} parent=1 // pred_check_branch
      %20 = sbr.rel (0) target = $region9
    $region8: #{tpu_custom_call.1} parent=1 // pred_region
      _
    $region9: #{tpu_custom_call.1} parent=1 // pred_fallthru
      _
    // Predicated region
    $region10: #{tpu_custom_call.1} parent=1 // pred_check
      _
    $region11: #{tpu_custom_call.1} parent=1 // pred_check_branch
      %22 = sbr.rel (0) target = $region13
    $region12: #{tpu_custom_call.1} parent=1 // pred_region
      %23 = dma.done [#allocation3], 32
    $region13: #{tpu_custom_call.1} parent=1 // pred_fallthru
      _
    %v24 = vld [vmem:[#allocation2] sm:$0x3]
    %v25 = vld [vmem:[%s1] sm:$0x1]
    %v27 = vlaneseq
    %v28 = vshrl.u32 %v27, 7
    %v29 = vsub.s32 0, %v28
    %v30 = vrot.slane %v25, %v29
    %v32 = vmul.f32 %v24, %v30
    %vm33 = vcmask 517120
    %34 = vst.msk [vmem:[#allocation5] sm:$0x3] %vm33, %v32
    // Predicated region
    $region14: #{tpu_custom_call.1} parent=1 // pred_check
      _
    $region15: #{tpu_custom_call.1} parent=1 // pred_check_branch
      %36 = sbr.rel (0) target = $region17
    $region16: #{tpu_custom_call.1} parent=1 // pred_region
      %s38 = ssub.s32 32, 32
      %39 = vsyncadd [#allocation4], %s38
      %s41 = sshll.u32 [#allocation5], 4
      %s42 = int_to_ptr.vmem [resolvable:$true] %s41
      %44 = dma.vmem_to_hbm [thread:$0]  %s42, 32, %s2, [#allocation4]
    $region17: #{tpu_custom_call.1} parent=1 // pred_fallthru
      _
    // Predicated region
    $region18: #{tpu_custom_call.1} parent=1 // pred_check
      _
    $region19: #{tpu_custom_call.1} parent=1 // pred_check_branch
      %46 = sbr.rel (0) target = $region21
    $region20: #{tpu_custom_call.1} parent=1 // pred_region
      %47 = dma.done [#allocation4], 32
    $region21: #{tpu_custom_call.1} parent=1 // pred_fallthru
      _
    %48 = vsyncpa [#allocation3], 1
    %49 = vsyncpa [#allocation4], 1

</llo_original>
